<compile_context>
chip_gen: v5e
topology: v5e:2x2
jax: 0.10.0
libtpu: 0.0.40
codegen_flags: <defaults>
</compile_context>

<pallas_src>
import functools

import jax
import jax.numpy as jnp
from jax import lax
from jax.experimental import pallas as pl
from jax.experimental.pallas import tpu as pltpu

BN_EPS = 1e-5
LANE = 128
SUBLANE = 8


def _round_up(x, m):
    return (x + m - 1) // m * m


def _vmem_limit(per_step_bytes):
    # double-buffered pipeline (x2) + extra headroom (x2) + compiler scratch,
    # capped well below physical VMEM (64 MiB per TensorCore on v7x).
    return int(min(4 * per_step_bytes + (2 << 20), 48 * 1024 * 1024))


# ---------------------------------------------------------------------------
# Pass 1: fused conv matmul (+ optional per-channel shift) + BN partial stats.
# ---------------------------------------------------------------------------
def _conv_kernel(p_ref, w_ref, shift_ref, o_ref, stats_ref, *, apply_shift):
    # p_ref     : (TM, Kp)    bf16 im2col patch tile (K = KH*KW*Cin, zero-padded)
    # w_ref     : (Kp, Cp)    bf16 weight matrix (Cout zero-padded to 128 lanes)
    # shift_ref : (1, Cp)     f32 per-channel shift (conv bias; bn=False path)
    # o_ref     : (TM, Cp)    f32 conv output tile (lane-dense)
    # stats_ref : (1, 8, Cp)  f32 per-tile stats: row0=sum, row1=sum of squares
    acc = jnp.dot(p_ref[...], w_ref[...], preferred_element_type=jnp.float32)
    if apply_shift:
        acc = acc + shift_ref[...]
    o_ref[...] = acc

    cp = acc.shape[1]
    ssum = jnp.sum(acc, axis=0, keepdims=True)            # (1, Cp)
    ssq = jnp.sum(acc * acc, axis=0, keepdims=True)       # (1, Cp)
    row = lax.broadcasted_iota(jnp.int32, (8, cp), 0)
    stats = jnp.where(row == 0, ssum, 0.0) + jnp.where(row == 1, ssq, 0.0)
    stats_ref[...] = stats[None]


# ---------------------------------------------------------------------------
# Pass 2: per-channel affine (BN normalize*gamma + beta), lane-dense tiles.
# ---------------------------------------------------------------------------
def _affine_kernel(h_ref, scale_ref, shift_ref, o_ref):
    o_ref[...] = h_ref[...] * scale_ref[...] + shift_ref[...]


def basic_conv2d(x_nchw, w_oihw, bias, gamma=None, beta=None, *, bn=True,
                 tile_m=256):
    """BasicConv2d.forward(x): NCHW f32 in/out, train-mode BN when bn=True."""
    N, Cin, H, W = x_nchw.shape
    Cout, _, KH, KW = w_oihw.shape
    ph, pw = KH // 2, KW // 2
    Hout = H + 2 * ph - KH + 1
    Wout = W + 2 * pw - KW + 1

    M = N * Hout * Wout
    K = KH * KW * Cin
    k_pad = _round_up(K, LANE)               # K-dense contraction (>=128)
    c_pad = _round_up(Cout, LANE)            # lane-dense output channels
    tm = min(tile_m, _round_up(M, SUBLANE))
    m_pad = _round_up(M, tm)
    num_tiles = m_pad // tm
    # TODO(synk): for large Cin/Cout also tile k_pad (an "arbitrary" reduction
    # axis with a VMEM scratch accumulator) and c_pad; not needed at these sizes.

    # ---- wrapper-side layout plumbing: NCHW -> NHWC, pad, im2col -----------
    # (For big activations the patch slab should instead be built per tile in
    #  VMEM from a haloed NHWC block to avoid the KH*KW x HBM expansion.)
    x = jnp.transpose(x_nchw, (0, 2, 3, 1)).astype(jnp.float32)
    x = jnp.pad(x, ((0, 0), (ph, ph), (pw, pw), (0, 0)))
    taps = [x[:, kh:kh + Hout, kw:kw + Wout, :]
            for kh in range(KH) for kw in range(KW)]
    patches = jnp.concatenate(taps, axis=-1).reshape(M, K)
    patches = jnp.pad(patches, ((0, m_pad - M), (0, k_pad - K)))
    patches = patches.astype(jnp.bfloat16)                 # MXU-native operand

    w = jnp.transpose(w_oihw, (2, 3, 1, 0)).astype(jnp.float32).reshape(K, Cout)
    w = jnp.pad(w, ((0, k_pad - K), (0, c_pad - Cout))).astype(jnp.bfloat16)

    bias_p = jnp.pad(bias.astype(jnp.float32), (0, c_pad - Cout))
    # When bn=True the conv bias is cancelled exactly by BN mean subtraction,
    # so it is dropped (no in-kernel add, no effect beyond ulps).
    shift1 = (jnp.zeros((1, c_pad), jnp.float32) if bn
              else bias_p.reshape(1, c_pad))

    per_step1 = (tm * k_pad * 2 + k_pad * c_pad * 2 + c_pad * 4
                 + tm * c_pad * 4 + 8 * c_pad * 4)
    conv_out, stats = pl.pallas_call(
        functools.partial(_conv_kernel, apply_shift=not bn),
        out_shape=(
            jax.ShapeDtypeStruct((m_pad, c_pad), jnp.float32),
            jax.ShapeDtypeStruct((num_tiles, 8, c_pad), jnp.float32),
        ),
        grid=(num_tiles,),
        in_specs=[
            pl.BlockSpec((tm, k_pad), lambda i: (i, 0)),
            pl.BlockSpec((k_pad, c_pad), lambda i: (0, 0)),
            pl.BlockSpec((1, c_pad), lambda i: (0, 0)),
        ],
        out_specs=(
            pl.BlockSpec((tm, c_pad), lambda i: (i, 0)),
            pl.BlockSpec((1, 8, c_pad), lambda i: (i, 0, 0)),
        ),
        compiler_params=pltpu.CompilerParams(
            dimension_semantics=("parallel",),
            vmem_limit_bytes=_vmem_limit(per_step1)),
    )(patches, w, shift1)

    if not bn:
        out = conv_out
    else:
        # Reduce the tiny per-tile partials and fold batch statistics (biased
        # variance, as in train-mode nn.BatchNorm2d) with gamma/beta/eps into
        # one per-channel scale & shift.
        count = jnp.float32(M)
        ssum = jnp.sum(stats[:, 0, :], axis=0)
        ssq = jnp.sum(stats[:, 1, :], axis=0)
        mean = ssum / count
        var = jnp.maximum(ssq / count - mean * mean, 0.0)
        inv = lax.rsqrt(var + BN_EPS)
        gamma_p = jnp.pad(gamma.astype(jnp.float32), (0, c_pad - Cout))
        beta_p = jnp.pad(beta.astype(jnp.float32), (0, c_pad - Cout))
        scale = (gamma_p * inv).reshape(1, c_pad)
        shift = (beta_p - mean * gamma_p * inv).reshape(1, c_pad)

        per_step2 = 2 * tm * c_pad * 4 + 2 * c_pad * 4
        out = pl.pallas_call(
            _affine_kernel,
            out_shape=jax.ShapeDtypeStruct((m_pad, c_pad), jnp.float32),
            grid=(num_tiles,),
            in_specs=[
                pl.BlockSpec((tm, c_pad), lambda i: (i, 0)),
                pl.BlockSpec((1, c_pad), lambda i: (0, 0)),
                pl.BlockSpec((1, c_pad), lambda i: (0, 0)),
            ],
            out_specs=pl.BlockSpec((tm, c_pad), lambda i: (i, 0)),
            compiler_params=pltpu.CompilerParams(
                dimension_semantics=("parallel",),
                vmem_limit_bytes=_vmem_limit(per_step2)),
        )(conv_out, scale, shift)

    out = out[:M, :Cout].reshape(N, Hout, Wout, Cout)
    # TODO(synk): keep NHWC end-to-end if the surrounding network allows it;
    # the boundary transposes are pure HBM round trips.
    return jnp.transpose(out, (0, 3, 1, 2))


def _reference(x_nchw, w_oihw, bias, gamma, beta, *, bn=True):
    """Pure-JAX f32 reference mirroring the PyTorch module (train-mode BN)."""
    Cout, _, KH, KW = w_oihw.shape
    out = lax.conv_general_dilated(
        x_nchw, w_oihw, window_strides=(1, 1),
        padding=[(KH // 2, KH // 2), (KW // 2, KW // 2)],
        dimension_numbers=("NCHW", "OIHW", "NCHW"))
    out = out + bias.reshape(1, Cout, 1, 1)
    if bn:
        mean = out.mean(axis=(0, 2, 3), keepdims=True)
        var = ((out - mean) ** 2).mean(axis=(0, 2, 3), keepdims=True)
        out = (out - mean) * lax.rsqrt(var + BN_EPS)
        out = out * gamma.reshape(1, Cout, 1, 1) + beta.reshape(1, Cout, 1, 1)
    return out


if __name__ == "__main__":
    # BasicConv2d(input_dim=4, output_dim=8, kernel_size=(3, 3), bn=...)
    N, Cin, H, W = 2, 4, 16, 16
    Cout, KH, KW = 8, 3, 3

    key = jax.random.PRNGKey(0)
    kx, kw, kb, kg, kbeta = jax.random.split(key, 5)
    x = jax.random.normal(kx, (N, Cin, H, W), dtype=jnp.float32)
    w = 0.1 * jax.random.normal(kw, (Cout, Cin, KH, KW), dtype=jnp.float32)
    b = 0.1 * jax.random.normal(kb, (Cout,), dtype=jnp.float32)
    gamma = 1.0 + 0.1 * jax.random.normal(kg, (Cout,), dtype=jnp.float32)
    beta = 0.1 * jax.random.normal(kbeta, (Cout,), dtype=jnp.float32)

    # bf16-rounded copies of the MXU operands for the tight numerical check.
    x_q = x.astype(jnp.bfloat16).astype(jnp.float32)
    w_q = w.astype(jnp.bfloat16).astype(jnp.float32)

    for use_bn in (True, False):
        out = jax.block_until_ready(
            basic_conv2d(x, w, b, gamma, beta, bn=use_bn))
        assert out.shape == (N, Cout, H, W)

        # Tight check: reference fed the same bf16-quantized conv operands
        # (validates the kernel math; accumulation/BN stats are f32).
        ref_q = _reference(x_q, w_q, b, gamma, beta, bn=use_bn)
        err_q = float(jnp.max(jnp.abs(out - ref_q)))
        assert jnp.allclose(out, ref_q, rtol=5e-3, atol=5e-3), (use_bn, err_q)

        # Loose check vs the full-f32 PyTorch-equivalent reference; tolerance
        # loosened per review because MXU inputs are bf16 on v6e/v7x.
        ref = _reference(x, w, b, gamma, beta, bn=use_bn)
        err = float(jnp.max(jnp.abs(out - ref)))
        assert jnp.allclose(out, ref, rtol=5e-2, atol=5e-2), (use_bn, err)

    print("KERNEL_OK")
</pallas_src>

<mosaic_0001>
module attributes {stable_mosaic.version = 11 : i64} {
  func.func @_conv_kernel(%arg0: i32, %arg1: memref<256x128xbf16, #tpu.memory_space<vmem>>, %arg2: memref<128x128xbf16, #tpu.memory_space<vmem>>, %arg3: memref<1x128xf32, #tpu.memory_space<vmem>>, %arg4: memref<256x128xf32, #tpu.memory_space<vmem>>, %arg5: memref<1x8x128xf32, #tpu.memory_space<vmem>>) attributes {dimension_semantics = [#tpu.dimension_semantics<parallel>], iteration_bounds = array<i64: 2>, scalar_prefetch = 0 : i64, scratch_operands = 0 : i64, tpu.core_type = #tpu.core_type<tc>, window_params = [{transform_indices = @transform_0, window_bounds = array<i64: 256, 128>}, {pipeline_mode = #tpu.pipeline_mode<synchronous>, transform_indices = @transform_1, window_bounds = array<i64: 128, 128>}, {pipeline_mode = #tpu.pipeline_mode<synchronous>, transform_indices = @transform_2, window_bounds = array<i64: 1, 128>}, {transform_indices = @transform_3, window_bounds = array<i64: 256, 128>}, {transform_indices = @transform_4, window_bounds = array<i64: 1, 8, 128>}]} {
    %c0 = arith.constant 0 : index
    %c0_0 = arith.constant 0 : index
    %0 = vector.load %arg1[%c0, %c0_0] : memref<256x128xbf16, #tpu.memory_space<vmem>>, vector<256x128xbf16>
    %c0_1 = arith.constant 0 : index
    %c0_2 = arith.constant 0 : index
    %1 = vector.load %arg2[%c0_1, %c0_2] : memref<128x128xbf16, #tpu.memory_space<vmem>>, vector<128x128xbf16>
    %cst = arith.constant dense<0.000000e+00> : vector<256x128xf32>
    %2 = tpu.matmul %0, %1, %cst {dimension_numbers = #tpu.dot_dimension_numbers<[1], [0], [0], [1], [0, 0, 1, 1], [], []>} : vector<256x128xbf16>, vector<128x128xbf16>, vector<256x128xf32> -> vector<256x128xf32>
    %c0_3 = arith.constant 0 : index
    %c0_4 = arith.constant 0 : index
    %3 = vector.load %arg4[%c0_3, %c0_4] : memref<256x128xf32, #tpu.memory_space<vmem>>, vector<256x128xf32>
    tpu.vector_store %arg4[%c0_3, %c0_4], %2 {strides = array<i32>} : memref<256x128xf32, #tpu.memory_space<vmem>>, vector<256x128xf32>,
    %cst_5 = arith.constant dense<0.000000e+00> : vector<128xf32>
    %4 = vector.multi_reduction <add>, %2, %cst_5 [0] : vector<256x128xf32> to vector<128xf32>
    %5 = vector.shape_cast %4 : vector<128xf32> to vector<1x128xf32>
    %6 = arith.mulf %2, %2 : vector<256x128xf32>
    %cst_6 = arith.constant dense<0.000000e+00> : vector<128xf32>
    %7 = vector.multi_reduction <add>, %6, %cst_6 [0] : vector<256x128xf32> to vector<128xf32>
    %8 = vector.shape_cast %7 : vector<128xf32> to vector<1x128xf32>
    %9 = tpu.iota {dimensions = array<i32: 0>} : vector<8x128xi32>
    %c0_i32 = arith.constant 0 : i32
    %10 = vector.broadcast %c0_i32 : i32 to vector<8x128xi32>
    %11 = arith.cmpi eq, %9, %10 : vector<8x128xi32>
    %cst_7 = arith.constant 0.000000e+00 : f32
    %12 = vector.shape_cast %5 : vector<1x128xf32> to vector<1x128xf32>
    %13 = vector.broadcast %12 : vector<1x128xf32> to vector<8x128xf32>
    %14 = vector.broadcast %cst_7 : f32 to vector<8x128xf32>
    %15 = arith.select %11, %13, %14 : vector<8x128xi1>, vector<8x128xf32>
    %c1_i32 = arith.constant 1 : i32
    %16 = vector.broadcast %c1_i32 : i32 to vector<8x128xi32>
    %17 = arith.cmpi eq, %9, %16 : vector<8x128xi32>
    %cst_8 = arith.constant 0.000000e+00 : f32
    %18 = vector.shape_cast %8 : vector<1x128xf32> to vector<1x128xf32>
    %19 = vector.broadcast %18 : vector<1x128xf32> to vector<8x128xf32>
    %20 = vector.broadcast %cst_8 : f32 to vector<8x128xf32>
    %21 = arith.select %17, %19, %20 : vector<8x128xi1>, vector<8x128xf32>
    %22 = arith.addf %15, %21 : vector<8x128xf32>
    %23 = vector.shape_cast %22 : vector<8x128xf32> to vector<1x8x128xf32>
    %c0_9 = arith.constant 0 : index
    %c0_10 = arith.constant 0 : index
    %c0_11 = arith.constant 0 : index
    %24 = vector.load %arg5[%c0_9, %c0_10, %c0_11] : memref<1x8x128xf32, #tpu.memory_space<vmem>>, vector<1x8x128xf32>
    tpu.vector_store %arg5[%c0_9, %c0_10, %c0_11], %23 {strides = array<i32>} : memref<1x8x128xf32, #tpu.memory_space<vmem>>, vector<1x8x128xf32>,
    return
  }
  func.func @transform_0(%arg0: i32) -> (i32, i32) {
    %c0_i32 = arith.constant 0 : i32
    %c0_i32_0 = arith.constant 0 : i32
    return %arg0, %c0_i32 : i32, i32
  }
  func.func @transform_1(%arg0: i32) -> (i32, i32) {
    %c0_i32 = arith.constant 0 : i32
    %c0_i32_0 = arith.constant 0 : i32
    %c0_i32_1 = arith.constant 0 : i32
    return %c0_i32, %c0_i32_0 : i32, i32
  }
  func.func @transform_2(%arg0: i32) -> (i32, i32) {
    %c0_i32 = arith.constant 0 : i32
    %c0_i32_0 = arith.constant 0 : i32
    %c0_i32_1 = arith.constant 0 : i32
    return %c0_i32, %c0_i32_0 : i32, i32
  }
  func.func @transform_3(%arg0: i32) -> (i32, i32) {
    %c0_i32 = arith.constant 0 : i32
    %c0_i32_0 = arith.constant 0 : i32
    return %arg0, %c0_i32 : i32, i32
  }
  func.func @transform_4(%arg0: i32) -> (i32, i32, i32) {
    %c0_i32 = arith.constant 0 : i32
    %c0_i32_0 = arith.constant 0 : i32
    %c0_i32_1 = arith.constant 0 : i32
    return %arg0, %c0_i32, %c0_i32_0 : i32, i32, i32
  }
}

</mosaic_0001>

<llo_original>
// kernel: tpu_custom_call.1
$region0: #{tpu_custom_call.1}
  #allocation0 [shape = 'u32[]', space=smem, size = 0x4, offset = 0x4, fixed_abs, tag = 'smem constant byte address 0x4 - core index']
  #allocation1 [shape = 'u32[72,128]{1,0:T(1,128)}', space=vmem, size = 0x9000, scoped, tag = 'internal scratch']
  %s0 = inlined_call_operand.hbm [shape: bf16[512,128], index: 0, kind: input, shape index: {}]
  %s1 = inlined_call_operand.hbm [shape: bf16[128,128], index: 1, kind: input, shape index: {}]
  %s2 = inlined_call_operand.vmem [shape: f32[1,128], index: 2, kind: input, shape index: {}]
  %s3 = inlined_call_operand.hbm [shape: f32[512,128], index: 3, kind: output, shape index: {0}]
  %s4 = inlined_call_operand.hbm [shape: f32[2,8,128], index: 4, kind: output, shape index: {1}]
  %5 = xla_tuple %s3, %s4
  %s6 = sld [smem:[#allocation0]]
  $region61: #{tpu_custom_call.1} parent=0
    _
  %s8 = ssub.s32 1, %s6
  %s9 = scalar_select 0, %s8, %s6
  $region1: #{tpu_custom_call.1} parent=0
    #allocation2 [shape = 'u8[131072]{0}', space=vmem, size = 0x20000, scoped, tag = 'input window, operand 0']
    #allocation3 [shape = 's32[2]{0}', space=sflag, size = 0x8, scoped, tag = 'scoped memory for tpu_custom_call.1']
    #allocation4 [shape = 's32[2]{0}', space=sflag, size = 0x8, scoped, tag = 'scoped memory for tpu_custom_call.1']
    #allocation5 [shape = 'u8[32768]{0}', space=vmem, size = 0x8000, scoped, tag = 'input window, operand 1, single buffered']
    #allocation6 [shape = 's32[1]{0}', space=sflag, size = 0x4, scoped, tag = 'scoped memory for tpu_custom_call.1']
    #allocation7 [shape = 'u8[262144]{0}', space=vmem, size = 0x40000, scoped, tag = 'output window, operand 0']
    #allocation8 [shape = 'u8[8192]{0}', space=vmem, size = 0x2000, scoped, tag = 'output window, operand 1']
    #allocation9 [shape = 's32[2]{0}', space=sflag, size = 0x8, scoped, tag = 'scoped memory for tpu_custom_call.1']
    %10 = vsyncpa [#allocation3], 0
    %s11 = scalar_lea.sflag [#allocation3], 1
    %12 = vsyncpa %s11, 0
    %13 = vsyncpa [#allocation6], 0
    %14 = vsyncpa [#allocation4], 0
    %s15 = scalar_lea.sflag [#allocation4], 1
    %16 = vsyncpa %s15, 0
    %17 = vsyncpa [#allocation9], 0
    %s18 = scalar_lea.sflag [#allocation9], 1
    %19 = vsyncpa %s18, 0
    loop: start=0, step=1, limit=4
    $region2: #{tpu_custom_call.1} parent=1 // loop_pre_header
      _
    $region3: #{tpu_custom_call.1} parent=1 // loop_header
      %s21 = sphi 0, %s25
      %p22 = scmp.ge.s32.totalorder %s21, 4
      %s31 = sphi 0, %s33
      %s34 = sphi 0, %s31
      %s35 = sphi 0, %s34
      %s51 = sphi 0, %s35
      %s55 = sphi 0, %s55
      %s57 = sphi 0, %s55
      %s58 = sphi 0, %s57
      %s72 = sphi 0, %s58
      %s76 = sphi 0, %s76
      %s78 = sphi 0, %s76
      %s79 = sphi 0, %s78
      %s93 = sphi 0, %s79
      %s99 = sphi 0, %s101
      %s102 = sphi 0, %s99
      %s103 = sphi 0, %s102
      %s119 = sphi 0, %s103
      %s125 = sphi 0, %s127
      %s128 = sphi 0, %s125
      %s129 = sphi 0, %s128
      %s145 = sphi 0, %s129
    $region4: #{tpu_custom_call.1} parent=1 // loop_header_branch
      %24 = sbr.rel (%p22) target = $region8
    $region5: #{tpu_custom_call.1} parent=1 // loop_body
      %s26 = ssub.s32 %s21, 1
      %s27 = ssub.s32 %s21, 2
      %s28 = sadd.s32 %s21, 1
      %s29 = ssub.s32 %s21, %s28
      %p30 = scmp.eq.s32.totalorder %s29, 0
      %s32 = sadd.s32 %s31, 1
      %s33 = scalar_select %p30, %s31, %s32
      %p36 = pneg %p30
      %p37 = scmp.eq.s32.totalorder %s21, 1
      %p38 = por %p36, %p37
      %p39 = scmp.ne.s32.totalorder %s31, %s34
      %p40 = scmp.eq.s32.totalorder %s21, 0
      %p41 = por %p39, %p40
      %p42 = scmp.ne.s32.totalorder %s31, %s34
      %p43 = scmp.eq.s32.totalorder %s26, 1
      %p44 = por %p42, %p43
      %p45 = scmp.ne.s32.totalorder %s34, %s35
      %p46 = scmp.eq.s32.totalorder %s26, 0
      %p47 = por %p45, %p46
      %p48 = scmp.ne.s32.totalorder %s34, %s35
      %p49 = scmp.eq.s32.totalorder %s27, 1
      %p50 = por %p48, %p49
      %p52 = scmp.ne.s32.totalorder %s35, %s51
      %p53 = scmp.eq.s32.totalorder %s27, 0
      %p54 = por %p52, %p53
      %s56 = sadd.s32 %s55, 1
      %p59 = scmp.eq.s32.totalorder %s21, 1
      %p60 = scmp.ne.s32.totalorder %s55, %s57
      %p61 = scmp.eq.s32.totalorder %s21, 0
      %p62 = por %p60, %p61
      %p63 = scmp.ne.s32.totalorder %s55, %s57
      %p64 = scmp.eq.s32.totalorder %s26, 1
      %p65 = por %p63, %p64
      %p66 = scmp.ne.s32.totalorder %s57, %s58
      %p67 = scmp.eq.s32.totalorder %s26, 0
      %p68 = por %p66, %p67
      %p69 = scmp.ne.s32.totalorder %s57, %s58
      %p70 = scmp.eq.s32.totalorder %s27, 1
      %p71 = por %p69, %p70
      %p73 = scmp.ne.s32.totalorder %s58, %s72
      %p74 = scmp.eq.s32.totalorder %s27, 0
      %p75 = por %p73, %p74
      %s77 = sadd.s32 %s76, 1
      %p80 = scmp.eq.s32.totalorder %s21, 1
      %p81 = scmp.ne.s32.totalorder %s76, %s78
      %p82 = scmp.eq.s32.totalorder %s21, 0
      %p83 = por %p81, %p82
      %p84 = scmp.ne.s32.totalorder %s76, %s78
      %p85 = scmp.eq.s32.totalorder %s26, 1
      %p86 = por %p84, %p85
      %p87 = scmp.ne.s32.totalorder %s78, %s79
      %p88 = scmp.eq.s32.totalorder %s26, 0
      %p89 = por %p87, %p88
      %p90 = scmp.ne.s32.totalorder %s78, %s79
      %p91 = scmp.eq.s32.totalorder %s27, 1
      %p92 = por %p90, %p91
      %p94 = scmp.ne.s32.totalorder %s79, %s93
      %p95 = scmp.eq.s32.totalorder %s27, 0
      %p96 = por %p94, %p95
      %s97 = ssub.s32 %s21, %s28
      %p98 = scmp.eq.s32.totalorder %s97, 0
      %s100 = sadd.s32 %s99, 1
      %s101 = scalar_select %p98, %s99, %s100
      %p104 = pneg %p98
      %p105 = scmp.eq.s32.totalorder %s21, 1
      %p106 = por %p104, %p105
      %p107 = scmp.ne.s32.totalorder %s99, %s102
      %p108 = scmp.eq.s32.totalorder %s21, 0
      %p109 = por %p107, %p108
      %p110 = scmp.ne.s32.totalorder %s99, %s102
      %p111 = scmp.eq.s32.totalorder %s26, 1
      %p112 = por %p110, %p111
      %p113 = scmp.ne.s32.totalorder %s102, %s103
      %p114 = scmp.eq.s32.totalorder %s26, 0
      %p115 = por %p113, %p114
      %p116 = scmp.ne.s32.totalorder %s102, %s103
      %p117 = scmp.eq.s32.totalorder %s27, 1
      %p118 = por %p116, %p117
      %p120 = scmp.ne.s32.totalorder %s103, %s119
      %p121 = scmp.eq.s32.totalorder %s27, 0
      %p122 = por %p120, %p121
      %s123 = ssub.s32 %s21, %s28
      %p124 = scmp.eq.s32.totalorder %s123, 0
      %s126 = sadd.s32 %s125, 1
      %s127 = scalar_select %p124, %s125, %s126
      %p130 = pneg %p124
      %p131 = scmp.eq.s32.totalorder %s21, 1
      %p132 = por %p130, %p131
      %p133 = scmp.ne.s32.totalorder %s125, %s128
      %p134 = scmp.eq.s32.totalorder %s21, 0
      %p135 = por %p133, %p134
      %p136 = scmp.ne.s32.totalorder %s125, %s128
      %p137 = scmp.eq.s32.totalorder %s26, 1
      %p138 = por %p136, %p137
      %p139 = scmp.ne.s32.totalorder %s128, %s129
      %p140 = scmp.eq.s32.totalorder %s26, 0
      %p141 = por %p139, %p140
      %p142 = scmp.ne.s32.totalorder %s128, %s129
      %p143 = scmp.eq.s32.totalorder %s27, 1
      %p144 = por %p142, %p143
      %p146 = scmp.ne.s32.totalorder %s129, %s145
      %p147 = scmp.eq.s32.totalorder %s27, 0
      %p148 = por %p146, %p147
      %p149 = scmp.le.s32.totalorder 1, %s21
      %p150 = scmp.lt.s32.totalorder %s21, 3
      %p151 = pnand %p149, %p150
      %p152 = pneg %p151
      // Predicated region
      $region9: #{tpu_custom_call.1} parent=5 // pred_check
        _
      $region10: #{tpu_custom_call.1} parent=5 // pred_check_branch
        %154 = sbr.rel (%p151) target = $region12
      $region11: #{tpu_custom_call.1} parent=5 // pred_region
        %s155 = ssub.s32 %s21, 1
        // Predicated region
        $region13: #{tpu_custom_call.1} parent=11 // pred_check
          %p156 = pneg %p68
        $region14: #{tpu_custom_call.1} parent=11 // pred_check_branch
          %158 = sbr.rel (%p156) target = $region16
        $region15: #{tpu_custom_call.1} parent=11 // pred_region
          %160 = vsyncadd [#allocation6], 0
          %s161 = sshll.u32 %s1, 4
          %s162 = int_to_ptr.hbm [resolvable:$true] %s161
          %s163 = sshll.u32 [#allocation5], 4
          %s164 = int_to_ptr.vmem [resolvable:$true] %s163
          %169 = dma.hbm_to_vmem [thread:$0]  %s162, 1024, %s164, [#allocation6], 64, 64, 4
        $region16: #{tpu_custom_call.1} parent=11 // pred_fallthru
          _
        // Predicated region
        $region17: #{tpu_custom_call.1} parent=11 // pred_check
          %p170 = pneg %p89
        $region18: #{tpu_custom_call.1} parent=11 // pred_check_branch
          %172 = sbr.rel (%p170) target = $region20
        $region19: #{tpu_custom_call.1} parent=11 // pred_region
          _
        $region20: #{tpu_custom_call.1} parent=11 // pred_fallthru
          _
      $region12: #{tpu_custom_call.1} parent=5 // pred_fallthru
        _
      %p173 = scmp.lt.s32.totalorder %s21, 2
      // Predicated region
      $region21: #{tpu_custom_call.1} parent=5 // pred_check
        %p174 = pneg %p173
      $region22: #{tpu_custom_call.1} parent=5 // pred_check_branch
        %176 = sbr.rel (%p174) target = $region24
      $region23: #{tpu_custom_call.1} parent=5 // pred_region
        // Predicated region
        $region25: #{tpu_custom_call.1} parent=23 // pred_check
          %p177 = pneg %p41
        $region26: #{tpu_custom_call.1} parent=23 // pred_check_branch
          %179 = sbr.rel (%p177) target = $region28
        $region27: #{tpu_custom_call.1} parent=23 // pred_region
          %s180 = sand.u32 %s31, 1
          %s181 = scalar_lea.sflag [#allocation3], %s180
          %s182 = sand.u32 %s31, 1
          %s183 = smul.addr %s182, 128
          %s184 = scalar_lea.vmem [#allocation2], %s183
          %s185 = smul.u32 32, %s21
          %187 = vsyncadd %s181, 0
          %s188 = smul.addr %s185, 4
          %s189 = scalar_lea.hbm %s0, %s188
          %s190 = sshll.u32 %s189, 4
          %s191 = int_to_ptr.hbm [resolvable:$true] %s190
          %s192 = sshll.u32 %s184, 4
          %s193 = int_to_ptr.vmem [resolvable:$true] %s192
          %198 = dma.hbm_to_vmem [thread:$0]  %s191, 2048, %s193, %s181, 64, 64, 4
        $region28: #{tpu_custom_call.1} parent=23 // pred_fallthru
          _
      $region24: #{tpu_custom_call.1} parent=5 // pred_fallthru
        _
      %p199 = scmp.le.s32.totalorder 1, %s21
      %p200 = scmp.lt.s32.totalorder %s21, 3
      %p201 = pnand %p199, %p200
      %p202 = pneg %p201
      // Predicated region
      $region29: #{tpu_custom_call.1} parent=5 // pred_check
        _
      $region30: #{tpu_custom_call.1} parent=5 // pred_check_branch
        %204 = sbr.rel (%p201) target = $region32
      $region31: #{tpu_custom_call.1} parent=5 // pred_region
        %s205 = ssub.s32 %s21, 1
        %s206 = sand.u32 %s34, 1
        %s207 = scalar_lea.sflag [#allocation3], %s206
        %s208 = sand.u32 %s34, 1
        %s209 = smul.addr %s208, 128
        %s210 = scalar_lea.vmem [#allocation2], %s209
        // Predicated region
        $region33: #{tpu_custom_call.1} parent=31 // pred_check
          %p211 = pneg %p47
        $region34: #{tpu_custom_call.1} parent=31 // pred_check_branch
          %213 = sbr.rel (%p211) target = $region36
        $region35: #{tpu_custom_call.1} parent=31 // pred_region
          %215 = dma.done %s207, 2048
        $region36: #{tpu_custom_call.1} parent=31 // pred_fallthru
          _
        // Predicated region
        $region37: #{tpu_custom_call.1} parent=31 // pred_check
          %p216 = pneg %p68
        $region38: #{tpu_custom_call.1} parent=31 // pred_check_branch
          %218 = sbr.rel (%p216) target = $region40
        $region39: #{tpu_custom_call.1} parent=31 // pred_region
          %220 = dma.done [#allocation6], 1024
        $region40: #{tpu_custom_call.1} parent=31 // pred_fallthru
          _
        %s221 = sand.u32 %s34, 1
        %s222 = scalar_lea.sflag [#allocation3], %s221
        %s223 = sand.u32 %s34, 1
        %s224 = smul.addr %s223, 128
        %s225 = scalar_lea.vmem [#allocation2], %s224
        %p226 = pneg %p47
        %p227 = pneg %p44
        %p228 = pneg %p68
        %p229 = pneg %p65
        %p230 = pneg %p89
        %p231 = pneg %p86
        %p232 = pneg %p115
        %p233 = pneg %p112
        %s234 = sand.u32 %s102, 1
        %s235 = scalar_lea.sflag [#allocation4], %s234
        %s236 = sand.u32 %s102, 1
        %s237 = smul.addr %s236, 256
        %s238 = scalar_lea.vmem [#allocation7], %s237
        %p239 = pneg %p141
        %p240 = pneg %p138
        %s241 = sand.u32 %s128, 1
        %s242 = scalar_lea.sflag [#allocation9], %s241
        %s243 = sand.u32 %s128, 1
        %s244 = smul.addr %s243, 8
        %s245 = scalar_lea.vmem [#allocation8], %s244
        %s246 = smul.u32 32, %s26
        %s247 = smul.u32 32, %s26
        %v248 = vld [vmem:[%s210] sm:$0xf]
        %v249 = vld [vmem:[%s210 + $0x4] sm:$0xf]
        %v250 = vld [vmem:[%s210 + $0x8] sm:$0xf]
        %v251 = vld [vmem:[%s210 + $0xc] sm:$0xf]
        %v252 = vld [vmem:[%s210 + $0x10] sm:$0xf]
        %v253 = vld [vmem:[%s210 + $0x14] sm:$0xf]
        %v254 = vld [vmem:[%s210 + $0x18] sm:$0xf]
        %v255 = vld [vmem:[%s210 + $0x1c] sm:$0xf]
        %v256 = vld [vmem:[%s210 + $0x20] sm:$0xf]
        %v257 = vld [vmem:[%s210 + $0x24] sm:$0xf]
        %v258 = vld [vmem:[%s210 + $0x28] sm:$0xf]
        %v259 = vld [vmem:[%s210 + $0x2c] sm:$0xf]
        %v260 = vld [vmem:[%s210 + $0x30] sm:$0xf]
        %v261 = vld [vmem:[%s210 + $0x34] sm:$0xf]
        %v262 = vld [vmem:[%s210 + $0x38] sm:$0xf]
        %v263 = vld [vmem:[%s210 + $0x3c] sm:$0xf]
        %v264 = vld [vmem:[%s210 + $0x40] sm:$0xf]
        %v265 = vld [vmem:[%s210 + $0x44] sm:$0xf]
        %v266 = vld [vmem:[%s210 + $0x48] sm:$0xf]
        %v267 = vld [vmem:[%s210 + $0x4c] sm:$0xf]
        %v268 = vld [vmem:[%s210 + $0x50] sm:$0xf]
        %v269 = vld [vmem:[%s210 + $0x54] sm:$0xf]
        %v270 = vld [vmem:[%s210 + $0x58] sm:$0xf]
        %v271 = vld [vmem:[%s210 + $0x5c] sm:$0xf]
        %v272 = vld [vmem:[%s210 + $0x60] sm:$0xf]
        %v273 = vld [vmem:[%s210 + $0x64] sm:$0xf]
        %v274 = vld [vmem:[%s210 + $0x68] sm:$0xf]
        %v275 = vld [vmem:[%s210 + $0x6c] sm:$0xf]
        %v276 = vld [vmem:[%s210 + $0x70] sm:$0xf]
        %v277 = vld [vmem:[%s210 + $0x74] sm:$0xf]
        %v278 = vld [vmem:[%s210 + $0x78] sm:$0xf]
        %v279 = vld [vmem:[%s210 + $0x7c] sm:$0xf]
        %v280 = vld [vmem:[#allocation5] sm:$0xf]
        %v281 = vld [vmem:[#allocation5 + $0x4] sm:$0xf]
        %v282 = vld [vmem:[#allocation5 + $0x8] sm:$0xf]
        %v283 = vld [vmem:[#allocation5 + $0xc] sm:$0xf]
        %v284 = vld [vmem:[#allocation5 + $0x10] sm:$0xf]
        %v285 = vld [vmem:[#allocation5 + $0x14] sm:$0xf]
        %v286 = vld [vmem:[#allocation5 + $0x18] sm:$0xf]
        %v287 = vld [vmem:[#allocation5 + $0x1c] sm:$0xf]
        %v288 = vld [vmem:[#allocation5 + $0x20] sm:$0xf]
        %v289 = vld [vmem:[#allocation5 + $0x24] sm:$0xf]
        %v290 = vld [vmem:[#allocation5 + $0x28] sm:$0xf]
        %v291 = vld [vmem:[#allocation5 + $0x2c] sm:$0xf]
        %v292 = vld [vmem:[#allocation5 + $0x30] sm:$0xf]
        %v293 = vld [vmem:[#allocation5 + $0x34] sm:$0xf]
        %v294 = vld [vmem:[#allocation5 + $0x38] sm:$0xf]
        %v295 = vld [vmem:[#allocation5 + $0x3c] sm:$0xf]
        %v328 = vunpack.c.l.b16 %v248
        %v329 = vunpack.c.l.b16 %v249
        %v330 = vunpack.c.l.b16 %v250
        %v331 = vunpack.c.l.b16 %v251
        %v332 = vunpack.c.l.b16 %v252
        %v333 = vunpack.c.l.b16 %v253
        %v334 = vunpack.c.l.b16 %v254
        %v335 = vunpack.c.l.b16 %v255
        %v336 = vunpack.c.l.b16 %v256
        %v337 = vunpack.c.l.b16 %v257
        %v338 = vunpack.c.l.b16 %v258
        %v339 = vunpack.c.l.b16 %v259
        %v340 = vunpack.c.l.b16 %v260
        %v341 = vunpack.c.l.b16 %v261
        %v342 = vunpack.c.l.b16 %v262
        %v343 = vunpack.c.l.b16 %v263
        %v344 = vunpack.c.l.b16 %v264
        %v345 = vunpack.c.l.b16 %v265
        %v346 = vunpack.c.l.b16 %v266
        %v347 = vunpack.c.l.b16 %v267
        %v348 = vunpack.c.l.b16 %v268
        %v349 = vunpack.c.l.b16 %v269
        %v350 = vunpack.c.l.b16 %v270
        %v351 = vunpack.c.l.b16 %v271
        %v352 = vunpack.c.l.b16 %v272
        %v353 = vunpack.c.l.b16 %v273
        %v354 = vunpack.c.l.b16 %v274
        %v355 = vunpack.c.l.b16 %v275
        %v356 = vunpack.c.l.b16 %v276
        %v357 = vunpack.c.l.b16 %v277
        %v358 = vunpack.c.l.b16 %v278
        %v359 = vunpack.c.l.b16 %v279
        %v360 = vpack.c.b16 %v329, %v328
        %v361 = vpack.c.b16 %v331, %v330
        %v362 = vpack.c.b16 %v333, %v332
        %v363 = vpack.c.b16 %v335, %v334
        %v364 = vpack.c.b16 %v337, %v336
        %v365 = vpack.c.b16 %v339, %v338
        %v366 = vpack.c.b16 %v341, %v340
        %v367 = vpack.c.b16 %v343, %v342
        %v368 = vpack.c.b16 %v345, %v344
        %v369 = vpack.c.b16 %v347, %v346
        %v370 = vpack.c.b16 %v349, %v348
        %v371 = vpack.c.b16 %v351, %v350
        %v372 = vpack.c.b16 %v353, %v352
        %v373 = vpack.c.b16 %v355, %v354
        %v374 = vpack.c.b16 %v357, %v356
        %v375 = vpack.c.b16 %v359, %v358
        %v408 = vunpack.c.l.b16 %v280
        %v409 = vunpack.c.l.b16 %v281
        %v410 = vunpack.c.l.b16 %v282
        %v411 = vunpack.c.l.b16 %v283
        %v412 = vunpack.c.l.b16 %v284
        %v413 = vunpack.c.l.b16 %v285
        %v414 = vunpack.c.l.b16 %v286
        %v415 = vunpack.c.l.b16 %v287
        %v416 = vunpack.c.l.b16 %v288
        %v417 = vunpack.c.l.b16 %v289
        %v418 = vunpack.c.l.b16 %v290
        %v419 = vunpack.c.l.b16 %v291
        %v420 = vunpack.c.l.b16 %v292
        %v421 = vunpack.c.l.b16 %v293
        %v422 = vunpack.c.l.b16 %v294
        %v423 = vunpack.c.l.b16 %v295
        %v424 = vpack.c.b16 %v409, %v408
        %v425 = vpack.c.b16 %v411, %v410
        %v426 = vpack.c.b16 %v413, %v412
        %v427 = vpack.c.b16 %v415, %v414
        %v428 = vpack.c.b16 %v417, %v416
        %v429 = vpack.c.b16 %v419, %v418
        %v430 = vpack.c.b16 %v421, %v420
        %v431 = vpack.c.b16 %v423, %v422
        %440 = vmatpush.bf16.msra.mxu0 %v431
        %441 = vmatpush.bf16.msra.mxu0 %v430
        %442 = vmatpush.bf16.msra.mxu0 %v429
        %443 = vmatpush.bf16.msra.mxu0 %v428
        %444 = vmatpush.bf16.msra.mxu0 %v427
        %445 = vmatpush.bf16.msra.mxu0 %v426
        %446 = vmatpush.bf16.msra.mxu0 %v425
        %447 = vmatpush.bf16.msra.mxu0 %v424
        %448 = vmatmul.bf16.gmra.mxu0 %v360
        %v449 = vpop.f32.mrf.mxu0
        %v450 = vadd.f32 0.0, %v449
        %v451 = vpop.f32.mrf.mxu0
        %v452 = vadd.f32 0.0, %v451
        %453 = vmatmul.bf16.gmra.mxu0 %v361
        %v454 = vpop.f32.mrf.mxu0
        %v455 = vadd.f32 0.0, %v454
        %v456 = vpop.f32.mrf.mxu0
        %v457 = vadd.f32 0.0, %v456
        %458 = vmatmul.bf16.gmra.mxu0 %v362
        %v459 = vpop.f32.mrf.mxu0
        %v460 = vadd.f32 0.0, %v459
        %v461 = vpop.f32.mrf.mxu0
        %v462 = vadd.f32 0.0, %v461
        %463 = vmatmul.bf16.gmra.mxu0 %v363
        %v464 = vpop.f32.mrf.mxu0
        %v465 = vadd.f32 0.0, %v464
        %v466 = vpop.f32.mrf.mxu0
        %v467 = vadd.f32 0.0, %v466
        %468 = vmatmul.bf16.gmra.mxu0 %v364
        %v469 = vpop.f32.mrf.mxu0
        %v470 = vadd.f32 0.0, %v469
        %v471 = vpop.f32.mrf.mxu0
        %v472 = vadd.f32 0.0, %v471
        %473 = vmatmul.bf16.gmra.mxu0 %v365
        %v474 = vpop.f32.mrf.mxu0
        %v475 = vadd.f32 0.0, %v474
        %v476 = vpop.f32.mrf.mxu0
        %v477 = vadd.f32 0.0, %v476
        %478 = vmatmul.bf16.gmra.mxu0 %v366
        %v479 = vpop.f32.mrf.mxu0
        %v480 = vadd.f32 0.0, %v479
        %v481 = vpop.f32.mrf.mxu0
        %v482 = vadd.f32 0.0, %v481
        %483 = vmatmul.bf16.gmra.mxu0 %v367
        %v484 = vpop.f32.mrf.mxu0
        %v485 = vadd.f32 0.0, %v484
        %v486 = vpop.f32.mrf.mxu0
        %v487 = vadd.f32 0.0, %v486
        %488 = vmatmul.bf16.gmra.mxu0 %v368
        %v489 = vpop.f32.mrf.mxu0
        %v490 = vadd.f32 0.0, %v489
        %v491 = vpop.f32.mrf.mxu0
        %v492 = vadd.f32 0.0, %v491
        %493 = vmatmul.bf16.gmra.mxu0 %v369
        %v494 = vpop.f32.mrf.mxu0
        %v495 = vadd.f32 0.0, %v494
        %v496 = vpop.f32.mrf.mxu0
        %v497 = vadd.f32 0.0, %v496
        %498 = vmatmul.bf16.gmra.mxu0 %v370
        %v499 = vpop.f32.mrf.mxu0
        %v500 = vadd.f32 0.0, %v499
        %v501 = vpop.f32.mrf.mxu0
        %v502 = vadd.f32 0.0, %v501
        %503 = vmatmul.bf16.gmra.mxu0 %v371
        %v504 = vpop.f32.mrf.mxu0
        %v505 = vadd.f32 0.0, %v504
        %v506 = vpop.f32.mrf.mxu0
        %v507 = vadd.f32 0.0, %v506
        %508 = vmatmul.bf16.gmra.mxu0 %v372
        %v509 = vpop.f32.mrf.mxu0
        %v510 = vadd.f32 0.0, %v509
        %v511 = vpop.f32.mrf.mxu0
        %v512 = vadd.f32 0.0, %v511
        %513 = vmatmul.bf16.gmra.mxu0 %v373
        %v514 = vpop.f32.mrf.mxu0
        %v515 = vadd.f32 0.0, %v514
        %v516 = vpop.f32.mrf.mxu0
        %v517 = vadd.f32 0.0, %v516
        %518 = vmatmul.bf16.gmra.mxu0 %v374
        %v519 = vpop.f32.mrf.mxu0
        %v520 = vadd.f32 0.0, %v519
        %v521 = vpop.f32.mrf.mxu0
        %v522 = vadd.f32 0.0, %v521
        %523 = vmatmul.bf16.gmra.mxu0 %v375
        %v524 = vpop.f32.mrf.mxu0
        %v525 = vadd.f32 0.0, %v524
        %v526 = vpop.f32.mrf.mxu0
        %v527 = vadd.f32 0.0, %v526
        %528 = vdwg.mxu0
        %529 = vst [vmem:[%s238] sm:$0xff] %v450
        %530 = vst [vmem:[%s238 + $0x8] sm:$0xff] %v452
        %531 = vst [vmem:[%s238 + $0x10] sm:$0xff] %v455
        %532 = vst [vmem:[%s238 + $0x18] sm:$0xff] %v457
        %533 = vst [vmem:[%s238 + $0x20] sm:$0xff] %v460
        %534 = vst [vmem:[%s238 + $0x28] sm:$0xff] %v462
        %535 = vst [vmem:[%s238 + $0x30] sm:$0xff] %v465
        %536 = vst [vmem:[%s238 + $0x38] sm:$0xff] %v467
        %537 = vst [vmem:[%s238 + $0x40] sm:$0xff] %v470
        %538 = vst [vmem:[%s238 + $0x48] sm:$0xff] %v472
        %539 = vst [vmem:[%s238 + $0x50] sm:$0xff] %v475
        %540 = vst [vmem:[%s238 + $0x58] sm:$0xff] %v477
        %541 = vst [vmem:[%s238 + $0x60] sm:$0xff] %v480
        %542 = vst [vmem:[%s238 + $0x68] sm:$0xff] %v482
        %543 = vst [vmem:[%s238 + $0x70] sm:$0xff] %v485
        %544 = vst [vmem:[%s238 + $0x78] sm:$0xff] %v487
        %545 = vst [vmem:[%s238 + $0x80] sm:$0xff] %v490
        %546 = vst [vmem:[%s238 + $0x88] sm:$0xff] %v492
        %547 = vst [vmem:[%s238 + $0x90] sm:$0xff] %v495
        %548 = vst [vmem:[%s238 + $0x98] sm:$0xff] %v497
        %549 = vst [vmem:[%s238 + $0xa0] sm:$0xff] %v500
        %550 = vst [vmem:[%s238 + $0xa8] sm:$0xff] %v502
        %551 = vst [vmem:[%s238 + $0xb0] sm:$0xff] %v505
        %552 = vst [vmem:[%s238 + $0xb8] sm:$0xff] %v507
        %553 = vst [vmem:[%s238 + $0xc0] sm:$0xff] %v510
        %554 = vst [vmem:[%s238 + $0xc8] sm:$0xff] %v512
        %555 = vst [vmem:[%s238 + $0xd0] sm:$0xff] %v515
        %556 = vst [vmem:[%s238 + $0xd8] sm:$0xff] %v517
        %557 = vst [vmem:[%s238 + $0xe0] sm:$0xff] %v520
        %558 = vst [vmem:[%s238 + $0xe8] sm:$0xff] %v522
        %559 = vst [vmem:[%s238 + $0xf0] sm:$0xff] %v525
        %560 = vst [vmem:[%s238 + $0xf8] sm:$0xff] %v527
        %v561 = vadd.f32 %v450, %v452
        %v562 = vadd.f32 %v561, %v455
        %v563 = vadd.f32 %v562, %v457
        %v564 = vadd.f32 %v563, %v460
        %v565 = vadd.f32 %v564, %v462
        %v566 = vadd.f32 %v565, %v465
        %v567 = vadd.f32 %v566, %v467
        %v568 = vadd.f32 %v567, %v470
        %v569 = vadd.f32 %v568, %v472
        %v570 = vadd.f32 %v569, %v475
        %v571 = vadd.f32 %v570, %v477
        %v572 = vadd.f32 %v571, %v480
        %v573 = vadd.f32 %v572, %v482
        %v574 = vadd.f32 %v573, %v485
        %v575 = vadd.f32 %v574, %v487
        %v576 = vadd.f32 %v575, %v490
        %v577 = vadd.f32 %v576, %v492
        %v578 = vadd.f32 %v577, %v495
        %v579 = vadd.f32 %v578, %v497
        %v580 = vadd.f32 %v579, %v500
        %v581 = vadd.f32 %v580, %v502
        %v582 = vadd.f32 %v581, %v505
        %v583 = vadd.f32 %v582, %v507
        %v584 = vadd.f32 %v583, %v510
        %v585 = vadd.f32 %v584, %v512
        %v586 = vadd.f32 %v585, %v515
        %v587 = vadd.f32 %v586, %v517
        %v588 = vadd.f32 %v587, %v520
        %v589 = vadd.f32 %v588, %v522
        %v590 = vadd.f32 %v589, %v525
        %v591 = vadd.f32 %v590, %v527
        %v592 = vrot.slane %v591, 4
        %v593 = vadd.f32 %v591, %v592
        %v594 = vrot.slane %v593, 2
        %v595 = vadd.f32 %v593, %v594
        %v596 = vrot.slane %v595, 1
        %v597 = vadd.f32 %v595, %v596
        %v598 = vmul.f32 %v450, %v450
        %v599 = vmul.f32 %v452, %v452
        %v600 = vmul.f32 %v455, %v455
        %v601 = vmul.f32 %v457, %v457
        %v602 = vmul.f32 %v460, %v460
        %v603 = vmul.f32 %v462, %v462
        %v604 = vmul.f32 %v465, %v465
        %v605 = vmul.f32 %v467, %v467
        %v606 = vmul.f32 %v470, %v470
        %v607 = vmul.f32 %v472, %v472
        %v608 = vmul.f32 %v475, %v475
        %v609 = vmul.f32 %v477, %v477
        %v610 = vmul.f32 %v480, %v480
        %v611 = vmul.f32 %v482, %v482
        %v612 = vmul.f32 %v485, %v485
        %v613 = vmul.f32 %v487, %v487
        %v614 = vmul.f32 %v490, %v490
        %v615 = vmul.f32 %v492, %v492
        %v616 = vmul.f32 %v495, %v495
        %v617 = vmul.f32 %v497, %v497
        %v618 = vmul.f32 %v500, %v500
        %v619 = vmul.f32 %v502, %v502
        %v620 = vmul.f32 %v505, %v505
        %v621 = vmul.f32 %v507, %v507
        %v622 = vmul.f32 %v510, %v510
        %v623 = vmul.f32 %v512, %v512
        %v624 = vmul.f32 %v515, %v515
        %v625 = vmul.f32 %v517, %v517
        %v626 = vmul.f32 %v520, %v520
        %v627 = vmul.f32 %v522, %v522
        %v628 = vmul.f32 %v525, %v525
        %v629 = vmul.f32 %v527, %v527
        %v630 = vadd.f32 %v598, %v599
        %v631 = vadd.f32 %v630, %v600
        %v632 = vadd.f32 %v631, %v601
        %v633 = vadd.f32 %v632, %v602
        %v634 = vadd.f32 %v633, %v603
        %v635 = vadd.f32 %v634, %v604
        %v636 = vadd.f32 %v635, %v605
        %v637 = vadd.f32 %v636, %v606
        %v638 = vadd.f32 %v637, %v607
        %v639 = vadd.f32 %v638, %v608
        %v640 = vadd.f32 %v639, %v609
        %v641 = vadd.f32 %v640, %v610
        %v642 = vadd.f32 %v641, %v611
        %v643 = vadd.f32 %v642, %v612
        %v644 = vadd.f32 %v643, %v613
        %v645 = vadd.f32 %v644, %v614
        %v646 = vadd.f32 %v645, %v615
        %v647 = vadd.f32 %v646, %v616
        %v648 = vadd.f32 %v647, %v617
        %v649 = vadd.f32 %v648, %v618
        %v650 = vadd.f32 %v649, %v619
        %v651 = vadd.f32 %v650, %v620
        %v652 = vadd.f32 %v651, %v621
        %v653 = vadd.f32 %v652, %v622
        %v654 = vadd.f32 %v653, %v623
        %v655 = vadd.f32 %v654, %v624
        %v656 = vadd.f32 %v655, %v625
        %v657 = vadd.f32 %v656, %v626
        %v658 = vadd.f32 %v657, %v627
        %v659 = vadd.f32 %v658, %v628
        %v660 = vadd.f32 %v659, %v629
        %v661 = vrot.slane %v660, 4
        %v662 = vadd.f32 %v660, %v661
        %v663 = vrot.slane %v662, 2
        %v664 = vadd.f32 %v662, %v663
        %v665 = vrot.slane %v664, 1
        %v666 = vadd.f32 %v664, %v665
        %v667 = vlaneseq
        %v668 = vshrl.u32 %v667, 7
        %vm669 = vcmp.eq.s32.totalorder %v668, 0
        %v670 = vsel %vm669, %v597, 0.0
        %vm671 = vcmp.eq.s32.totalorder %v668, 1
        %v672 = vsel %vm671, %v666, 0.0
        %v673 = vadd.f32 %v670, %v672
        %674 = vst [vmem:[%s245] sm:$0xff] %v673
        %s675 = sand.u32 %s102, 1
        %s676 = scalar_lea.sflag [#allocation4], %s675
        %s677 = sand.u32 %s102, 1
        %s678 = smul.addr %s677, 256
        %s679 = scalar_lea.vmem [#allocation7], %s678
        %s680 = sand.u32 %s128, 1
        %s681 = scalar_lea.sflag [#allocation9], %s680
        %s682 = sand.u32 %s128, 1
        %s683 = smul.addr %s682, 8
        %s684 = scalar_lea.vmem [#allocation8], %s683
        // Predicated region
        $region41: #{tpu_custom_call.1} parent=31 // pred_check
          %p685 = pneg %p112
        $region42: #{tpu_custom_call.1} parent=31 // pred_check_branch
          %687 = sbr.rel (%p685) target = $region44
        $region43: #{tpu_custom_call.1} parent=31 // pred_region
          %s688 = smul.u32 32, %s26
          %690 = vsyncadd %s676, 0
          %s691 = smul.addr %s688, 8
          %s692 = scalar_lea.hbm %s3, %s691
          %s693 = sshll.u32 %s679, 4
          %s694 = int_to_ptr.vmem [resolvable:$true] %s693
          %s695 = sshll.u32 %s692, 4
          %s696 = int_to_ptr.hbm [resolvable:$true] %s695
          %701 = dma.vmem_to_hbm [thread:$0]  %s694, 4096, %s696, %s676, 128, 128, 8
        $region44: #{tpu_custom_call.1} parent=31 // pred_fallthru
          _
        // Predicated region
        $region45: #{tpu_custom_call.1} parent=31 // pred_check
          %p702 = pneg %p138
        $region46: #{tpu_custom_call.1} parent=31 // pred_check_branch
          %704 = sbr.rel (%p702) target = $region48
        $region47: #{tpu_custom_call.1} parent=31 // pred_region
          %706 = vsyncadd %s681, 0
          %s707 = smul.addr %s26, 8
          %s708 = scalar_lea.hbm %s4, %s707
          %s710 = sshll.u32 %s684, 4
          %s711 = int_to_ptr.vmem [resolvable:$true] %s710
          %s712 = sshll.u32 %s708, 4
          %s713 = int_to_ptr.hbm [resolvable:$true] %s712
          %715 = dma.vmem_to_hbm [thread:$0]  %s711, 128, %s713, %s681
        $region48: #{tpu_custom_call.1} parent=31 // pred_fallthru
          _
      $region32: #{tpu_custom_call.1} parent=5 // pred_fallthru
        _
      %p716 = scmp.le.s32.totalorder 2, %s21
      // Predicated region
      $region49: #{tpu_custom_call.1} parent=5 // pred_check
        %p717 = pneg %p716
      $region50: #{tpu_custom_call.1} parent=5 // pred_check_branch
        %719 = sbr.rel (%p717) target = $region52
      $region51: #{tpu_custom_call.1} parent=5 // pred_region
        %s720 = ssub.s32 %s21, 2
        // Predicated region
        $region53: #{tpu_custom_call.1} parent=51 // pred_check
          %p721 = pneg %p118
        $region54: #{tpu_custom_call.1} parent=51 // pred_check_branch
          %723 = sbr.rel (%p721) target = $region56
        $region55: #{tpu_custom_call.1} parent=51 // pred_region
          %s724 = sand.u32 %s103, 1
          %s725 = scalar_lea.sflag [#allocation4], %s724
          %s726 = sand.u32 %s103, 1
          %s727 = smul.addr %s726, 256
          %s728 = scalar_lea.vmem [#allocation7], %s727
          %730 = dma.done %s725, 4096
        $region56: #{tpu_custom_call.1} parent=51 // pred_fallthru
          _
        // Predicated region
        $region57: #{tpu_custom_call.1} parent=51 // pred_check
          %p731 = pneg %p144
        $region58: #{tpu_custom_call.1} parent=51 // pred_check_branch
          %733 = sbr.rel (%p731) target = $region60
        $region59: #{tpu_custom_call.1} parent=51 // pred_region
          %s734 = sand.u32 %s129, 1
          %s735 = scalar_lea.sflag [#allocation9], %s734
          %s736 = sand.u32 %s129, 1
          %s737 = smul.addr %s736, 8
          %s738 = scalar_lea.vmem [#allocation8], %s737
          %740 = dma.done %s735, 128
        $region60: #{tpu_custom_call.1} parent=51 // pred_fallthru
          _
      $region52: #{tpu_custom_call.1} parent=5 // pred_fallthru
        _
    $region6: #{tpu_custom_call.1} parent=1 // loop_footer
      %s25 = sadd.s32 1, %s21
    $region7: #{tpu_custom_call.1} parent=1 // loop_footer_branch
      %20 = sbr.rel target = $region3
    $region8: #{tpu_custom_call.1} parent=1 // loop_exit
      _
    %741 = vsyncpa [#allocation3], 1
    %s742 = scalar_lea.sflag [#allocation3], 1
    %743 = vsyncpa %s742, 1
    %744 = vsyncpa [#allocation6], 1
    %745 = vsyncpa [#allocation4], 1
    %s746 = scalar_lea.sflag [#allocation4], 1
    %747 = vsyncpa %s746, 1
    %748 = vsyncpa [#allocation9], 1
    %s749 = scalar_lea.sflag [#allocation9], 1
    %750 = vsyncpa %s749, 1

</llo_original>
